<compile_context>
chip_gen: v5e
topology: v5e:2x2
jax: 0.10.0
libtpu: 0.0.40
codegen_flags: <defaults>
</compile_context>

<pallas_src>
import functools

import jax
import jax.numpy as jnp
from jax.experimental import pallas as pl
from jax.experimental.pallas import tpu as pltpu

_LANE = 128     # lane width: last dim of every tile is a multiple of this
_SUBLANE = 8    # sublane width: batch tile is a multiple of this


def _round_up(x: int, m: int) -> int:
    return ((x + m - 1) // m) * m


def _mlp_kernel(x_ref, *refs, n_layers: int):
    """Fused MLP: Linear -> ReLU -> ... -> Linear, all in VMEM.

    refs = (w0, b0, w1, b1, ..., w_{L-1}, b_{L-1}, o_ref)
    Intermediate activations stay in vregs/VMEM; only the final layer's output
    is stored to the (lane-dense) output block.
    """
    o_ref = refs[2 * n_layers]
    h = x_ref[...]
    for k in range(n_layers):
        w_ref = refs[2 * k]
        b_ref = refs[2 * k + 1]
        # MXU matmul with f32 accumulation; bias + ReLU on the f32 accumulator.
        y = jnp.dot(h.astype(w_ref.dtype), w_ref[...],
                    preferred_element_type=jnp.float32)
        y = y + b_ref[...].astype(jnp.float32)
        if k < n_layers - 1:            # activ_last_layer=False
            y = jnp.maximum(y, 0.0)
        h = y
    o_ref[...] = h.astype(o_ref.dtype)


def init_mlp_params(key, hidden_size):
    """Deterministic init mimicking torch.nn.Linear default (uniform +/- 1/sqrt(fan_in)).

    Weights are stored as (in_dim, out_dim) == torch weight.T so the kernel does x @ W.
    """
    params = []
    for i in range(len(hidden_size) - 1):
        in_dim, out_dim = hidden_size[i], hidden_size[i + 1]
        key, kw, kb = jax.random.split(key, 3)
        bound = 1.0 / jnp.sqrt(jnp.float32(in_dim))
        w = jax.random.uniform(kw, (in_dim, out_dim), jnp.float32, -bound, bound)
        b = jax.random.uniform(kb, (out_dim,), jnp.float32, -bound, bound)
        params.append((w, b))
    return params


def prepare_params(params, compute_dtype=jnp.float32):
    """Zero-pad every layer's feature dims up to multiples of 128 (lane-dense).

    Padding is done once, outside the hot path. Zero-padded weight rows/columns
    and bias entries are inert through matmul + bias + ReLU.
    Returns (padded_params, dims, dims_padded).
    """
    dims = [params[0][0].shape[0]] + [w.shape[1] for (w, _) in params]
    dims_p = [_round_up(d, _LANE) for d in dims]
    padded = []
    for k, (w, b) in enumerate(params):
        kp, np_ = dims_p[k], dims_p[k + 1]
        w_p = jnp.zeros((kp, np_), compute_dtype)
        w_p = w_p.at[: w.shape[0], : w.shape[1]].set(w.astype(compute_dtype))
        b_p = jnp.zeros((1, np_), jnp.float32)
        b_p = b_p.at[0, : b.shape[0]].set(b.astype(jnp.float32))
        padded.append((w_p, b_p))
    return padded, dims, dims_p


def mlp_forward(x, padded_params, dims, dims_p, *,
                out_dtype=jnp.float32, block_m=128,
                compute_dtype=jnp.float32):
    """Fused MLP forward: one pallas_call for the whole network."""
    n_layers = len(padded_params)
    M, K0 = x.shape
    assert K0 == dims[0]

    # Batch tiling: single block for tiny batches, 128-row blocks (parallel grid
    # axis -> megacore on v7x) once the batch grows.
    tm = min(_round_up(block_m, _SUBLANE), _round_up(M, _SUBLANE))
    M_p = _round_up(M, tm)
    grid_m = M_p // tm

    # Lane-dense, zero-padded input (padded rows/cols are sliced away below).
    x_p = jnp.zeros((M_p, dims_p[0]), compute_dtype)
    x_p = x_p.at[:M, :K0].set(x.astype(compute_dtype))

    flat_params = []
    in_specs = [pl.BlockSpec((tm, dims_p[0]), lambda i: (i, 0))]
    for (w_p, b_p) in padded_params:
        flat_params += [w_p, b_p]
        in_specs.append(pl.BlockSpec(w_p.shape, lambda i: (0, 0)))
        in_specs.append(pl.BlockSpec(b_p.shape, lambda i: (0, 0)))
    out_spec = pl.BlockSpec((tm, dims_p[-1]), lambda i: (i, 0))

    flops = 2 * M_p * sum(dims_p[k] * dims_p[k + 1] for k in range(n_layers))
    bytes_accessed = (x_p.size * x_p.dtype.itemsize
                      + sum(a.size * a.dtype.itemsize for a in flat_params)
                      + M_p * dims_p[-1] * jnp.dtype(out_dtype).itemsize)

    kernel = functools.partial(_mlp_kernel, n_layers=n_layers)
    y_p = pl.pallas_call(
        kernel,
        out_shape=jax.ShapeDtypeStruct((M_p, dims_p[-1]), out_dtype),
        grid=(grid_m,),
        in_specs=in_specs,
        out_specs=out_spec,
        compiler_params=pltpu.CompilerParams(
            dimension_semantics=("parallel",),
        ),
        cost_estimate=pl.CostEstimate(
            flops=flops, transcendentals=0, bytes_accessed=bytes_accessed),
    )(x_p, *flat_params)

    # Slice back to the true (batch, out_dim).
    return y_p[:M, : dims[-1]]


def mlp_reference(x, params):
    """Pure-JAX reference (unpadded) for correctness check."""
    n_layers = len(params)
    out = x
    for i, (w, b) in enumerate(params):
        out = out @ w + b
        if i < n_layers - 1:
            out = jnp.maximum(out, 0.0)
    return out


if __name__ == "__main__":
    key = jax.random.PRNGKey(0)
    hidden_size = [32, 64, 48, 16]  # Linear(32,64) ReLU Linear(64,48) ReLU Linear(48,16)
    batch = 8

    key, kx = jax.random.split(key)
    x = jax.random.normal(kx, (batch, hidden_size[0]), jnp.float32)
    params = init_mlp_params(key, hidden_size)

    # f32 compute keeps the tight tolerance check; pass compute_dtype=jnp.bfloat16
    # on v6e/v7x at larger hidden sizes for MXU / DMA savings.
    padded_params, dims, dims_p = prepare_params(params, compute_dtype=jnp.float32)

    fwd = jax.jit(lambda xx, pp: mlp_forward(xx, pp, dims, dims_p))
    y = fwd(x, padded_params)
    y = jax.block_until_ready(y)

    y_ref = mlp_reference(x, params)
    assert y.shape == (batch, hidden_size[-1])
    assert jnp.allclose(y, y_ref, atol=1e-5, rtol=1e-5)

    print("KERNEL_OK")
</pallas_src>

<mosaic_0001>
module attributes {stable_mosaic.version = 11 : i64} {
  func.func @_mlp_kernel(%arg0: i32, %arg1: memref<8x128xf32, #tpu.memory_space<vmem>>, %arg2: memref<128x128xf32, #tpu.memory_space<vmem>>, %arg3: memref<1x128xf32, #tpu.memory_space<vmem>>, %arg4: memref<128x128xf32, #tpu.memory_space<vmem>>, %arg5: memref<1x128xf32, #tpu.memory_space<vmem>>, %arg6: memref<128x128xf32, #tpu.memory_space<vmem>>, %arg7: memref<1x128xf32, #tpu.memory_space<vmem>>, %arg8: memref<8x128xf32, #tpu.memory_space<vmem>>) attributes {dimension_semantics = [#tpu.dimension_semantics<parallel>], iteration_bounds = array<i64: 1>, scalar_prefetch = 0 : i64, scratch_operands = 0 : i64, tpu.core_type = #tpu.core_type<tc>, window_params = [{transform_indices = @transform_0, window_bounds = array<i64: 8, 128>}, {pipeline_mode = #tpu.pipeline_mode<synchronous>, transform_indices = @transform_1, window_bounds = array<i64: 128, 128>}, {pipeline_mode = #tpu.pipeline_mode<synchronous>, transform_indices = @transform_2, window_bounds = array<i64: 1, 128>}, {pipeline_mode = #tpu.pipeline_mode<synchronous>, transform_indices = @transform_3, window_bounds = array<i64: 128, 128>}, {pipeline_mode = #tpu.pipeline_mode<synchronous>, transform_indices = @transform_4, window_bounds = array<i64: 1, 128>}, {pipeline_mode = #tpu.pipeline_mode<synchronous>, transform_indices = @transform_5, window_bounds = array<i64: 128, 128>}, {pipeline_mode = #tpu.pipeline_mode<synchronous>, transform_indices = @transform_6, window_bounds = array<i64: 1, 128>}, {transform_indices = @transform_7, window_bounds = array<i64: 8, 128>}]} {
    %c0 = arith.constant 0 : index
    %c0_0 = arith.constant 0 : index
    %0 = vector.load %arg1[%c0, %c0_0] : memref<8x128xf32, #tpu.memory_space<vmem>>, vector<8x128xf32>
    %c0_1 = arith.constant 0 : index
    %c0_2 = arith.constant 0 : index
    %1 = vector.load %arg2[%c0_1, %c0_2] : memref<128x128xf32, #tpu.memory_space<vmem>>, vector<128x128xf32>
    %cst = arith.constant dense<0.000000e+00> : vector<8x128xf32>
    %2 = tpu.matmul %0, %1, %cst {dimension_numbers = #tpu.dot_dimension_numbers<[1], [0], [0], [1], [0, 0, 1, 1], [], []>} : vector<8x128xf32>, vector<128x128xf32>, vector<8x128xf32> -> vector<8x128xf32>
    %c0_3 = arith.constant 0 : index
    %c0_4 = arith.constant 0 : index
    %3 = vector.load %arg3[%c0_3, %c0_4] : memref<1x128xf32, #tpu.memory_space<vmem>>, vector<1x128xf32>
    %4 = vector.broadcast %3 : vector<1x128xf32> to vector<8x128xf32>
    %5 = arith.addf %2, %4 : vector<8x128xf32>
    %cst_5 = arith.constant 0.000000e+00 : f32
    %6 = vector.broadcast %cst_5 : f32 to vector<8x128xf32>
    %7 = arith.maximumf %5, %6 : vector<8x128xf32>
    %c0_6 = arith.constant 0 : index
    %c0_7 = arith.constant 0 : index
    %8 = vector.load %arg4[%c0_6, %c0_7] : memref<128x128xf32, #tpu.memory_space<vmem>>, vector<128x128xf32>
    %cst_8 = arith.constant dense<0.000000e+00> : vector<8x128xf32>
    %9 = tpu.matmul %7, %8, %cst_8 {dimension_numbers = #tpu.dot_dimension_numbers<[1], [0], [0], [1], [0, 0, 1, 1], [], []>} : vector<8x128xf32>, vector<128x128xf32>, vector<8x128xf32> -> vector<8x128xf32>
    %c0_9 = arith.constant 0 : index
    %c0_10 = arith.constant 0 : index
    %10 = vector.load %arg5[%c0_9, %c0_10] : memref<1x128xf32, #tpu.memory_space<vmem>>, vector<1x128xf32>
    %11 = vector.broadcast %10 : vector<1x128xf32> to vector<8x128xf32>
    %12 = arith.addf %9, %11 : vector<8x128xf32>
    %cst_11 = arith.constant 0.000000e+00 : f32
    %13 = vector.broadcast %cst_11 : f32 to vector<8x128xf32>
    %14 = arith.maximumf %12, %13 : vector<8x128xf32>
    %c0_12 = arith.constant 0 : index
    %c0_13 = arith.constant 0 : index
    %15 = vector.load %arg6[%c0_12, %c0_13] : memref<128x128xf32, #tpu.memory_space<vmem>>, vector<128x128xf32>
    %cst_14 = arith.constant dense<0.000000e+00> : vector<8x128xf32>
    %16 = tpu.matmul %14, %15, %cst_14 {dimension_numbers = #tpu.dot_dimension_numbers<[1], [0], [0], [1], [0, 0, 1, 1], [], []>} : vector<8x128xf32>, vector<128x128xf32>, vector<8x128xf32> -> vector<8x128xf32>
    %c0_15 = arith.constant 0 : index
    %c0_16 = arith.constant 0 : index
    %17 = vector.load %arg7[%c0_15, %c0_16] : memref<1x128xf32, #tpu.memory_space<vmem>>, vector<1x128xf32>
    %18 = vector.broadcast %17 : vector<1x128xf32> to vector<8x128xf32>
    %19 = arith.addf %16, %18 : vector<8x128xf32>
    %c0_17 = arith.constant 0 : index
    %c0_18 = arith.constant 0 : index
    %20 = vector.load %arg8[%c0_17, %c0_18] : memref<8x128xf32, #tpu.memory_space<vmem>>, vector<8x128xf32>
    tpu.vector_store %arg8[%c0_17, %c0_18], %19 {strides = array<i32>} : memref<8x128xf32, #tpu.memory_space<vmem>>, vector<8x128xf32>,
    return
  }
  func.func @transform_0(%arg0: i32) -> (i32, i32) {
    %c0_i32 = arith.constant 0 : i32
    %c0_i32_0 = arith.constant 0 : i32
    return %arg0, %c0_i32 : i32, i32
  }
  func.func @transform_1(%arg0: i32) -> (i32, i32) {
    %c0_i32 = arith.constant 0 : i32
    %c0_i32_0 = arith.constant 0 : i32
    %c0_i32_1 = arith.constant 0 : i32
    return %c0_i32, %c0_i32_0 : i32, i32
  }
  func.func @transform_2(%arg0: i32) -> (i32, i32) {
    %c0_i32 = arith.constant 0 : i32
    %c0_i32_0 = arith.constant 0 : i32
    %c0_i32_1 = arith.constant 0 : i32
    return %c0_i32, %c0_i32_0 : i32, i32
  }
  func.func @transform_3(%arg0: i32) -> (i32, i32) {
    %c0_i32 = arith.constant 0 : i32
    %c0_i32_0 = arith.constant 0 : i32
    %c0_i32_1 = arith.constant 0 : i32
    return %c0_i32, %c0_i32_0 : i32, i32
  }
  func.func @transform_4(%arg0: i32) -> (i32, i32) {
    %c0_i32 = arith.constant 0 : i32
    %c0_i32_0 = arith.constant 0 : i32
    %c0_i32_1 = arith.constant 0 : i32
    return %c0_i32, %c0_i32_0 : i32, i32
  }
  func.func @transform_5(%arg0: i32) -> (i32, i32) {
    %c0_i32 = arith.constant 0 : i32
    %c0_i32_0 = arith.constant 0 : i32
    %c0_i32_1 = arith.constant 0 : i32
    return %c0_i32, %c0_i32_0 : i32, i32
  }
  func.func @transform_6(%arg0: i32) -> (i32, i32) {
    %c0_i32 = arith.constant 0 : i32
    %c0_i32_0 = arith.constant 0 : i32
    %c0_i32_1 = arith.constant 0 : i32
    return %c0_i32, %c0_i32_0 : i32, i32
  }
  func.func @transform_7(%arg0: i32) -> (i32, i32) {
    %c0_i32 = arith.constant 0 : i32
    %c0_i32_0 = arith.constant 0 : i32
    return %arg0, %c0_i32 : i32, i32
  }
}

</mosaic_0001>

<llo_original>
// kernel: _lambda_.1
$region0: #{_lambda_.1}
  #allocation0 [shape = 'u32[]', space=smem, size = 0x4, offset = 0x4, fixed_abs, tag = 'smem constant byte address 0x4 - core index']
  #allocation1 [shape = 'u32[72,128]{1,0:T(1,128)}', space=vmem, size = 0x9000, scoped, tag = 'internal scratch']
  %s0 = inlined_call_operand.vmem [shape: f32[8,128], index: 0, kind: input, shape index: {}]
  %s1 = inlined_call_operand.hbm [shape: f32[128,128], index: 1, kind: input, shape index: {}]
  %s2 = inlined_call_operand.vmem [shape: f32[1,128], index: 2, kind: input, shape index: {}]
  %s3 = inlined_call_operand.hbm [shape: f32[128,128], index: 3, kind: input, shape index: {}]
  %s4 = inlined_call_operand.vmem [shape: f32[1,128], index: 4, kind: input, shape index: {}]
  %s5 = inlined_call_operand.hbm [shape: f32[128,128], index: 5, kind: input, shape index: {}]
  %s6 = inlined_call_operand.vmem [shape: f32[1,128], index: 6, kind: input, shape index: {}]
  %s7 = inlined_call_operand.hbm [shape: f32[8,128], index: 7, kind: output, shape index: {}]
  %s8 = sld [smem:[#allocation0]]
  $region50: #{_lambda_.1} parent=0
    _
  %s10 = ssub.s32 1, %s8
  %s11 = scalar_select 0, %s10, %s8
  $region1: #{_lambda_.1} parent=0
    #allocation2 [shape = 'u8[65536]{0}', space=vmem, size = 0x10000, scoped, tag = 'input window, operand 1, single buffered']
    #allocation3 [shape = 's32[1]{0}', space=sflag, size = 0x4, scoped, tag = 'scoped memory for _lambda_.1']
    #allocation4 [shape = 's32[1]{0}', space=sflag, size = 0x4, scoped, tag = 'scoped memory for _lambda_.1']
    #allocation5 [shape = 'u8[65536]{0}', space=vmem, size = 0x10000, scoped, tag = 'input window, operand 3, single buffered']
    #allocation6 [shape = 's32[1]{0}', space=sflag, size = 0x4, scoped, tag = 'scoped memory for _lambda_.1']
    #allocation7 [shape = 'u8[65536]{0}', space=vmem, size = 0x10000, scoped, tag = 'input window, operand 5, single buffered']
    #allocation8 [shape = 'u8[4096]{0}', space=vmem, size = 0x1000, scoped, tag = 'output window, operand 0, single buffered']
    %12 = vsyncpa [#allocation3], 0
    %13 = vsyncpa [#allocation6], 0
    %14 = vsyncpa [#allocation4], 0
    // Predicated region
    $region2: #{_lambda_.1} parent=1 // pred_check
      _
    $region3: #{_lambda_.1} parent=1 // pred_check_branch
      %16 = sbr.rel (0) target = $region5
    $region4: #{_lambda_.1} parent=1 // pred_region
      _
    $region5: #{_lambda_.1} parent=1 // pred_fallthru
      _
    // Predicated region
    $region6: #{_lambda_.1} parent=1 // pred_check
      _
    $region7: #{_lambda_.1} parent=1 // pred_check_branch
      %18 = sbr.rel (0) target = $region9
    $region8: #{_lambda_.1} parent=1 // pred_region
      %20 = vsyncadd [#allocation3], 0
      %s21 = sshll.u32 %s1, 4
      %s22 = int_to_ptr.hbm [resolvable:$true] %s21
      %s23 = sshll.u32 [#allocation2], 4
      %s24 = int_to_ptr.vmem [resolvable:$true] %s23
      %29 = dma.hbm_to_vmem [thread:$0]  %s22, 2048, %s24, [#allocation3], 128, 128, 8
    $region9: #{_lambda_.1} parent=1 // pred_fallthru
      _
    // Predicated region
    $region10: #{_lambda_.1} parent=1 // pred_check
      _
    $region11: #{_lambda_.1} parent=1 // pred_check_branch
      %31 = sbr.rel (0) target = $region13
    $region12: #{_lambda_.1} parent=1 // pred_region
      _
    $region13: #{_lambda_.1} parent=1 // pred_fallthru
      _
    // Predicated region
    $region14: #{_lambda_.1} parent=1 // pred_check
      _
    $region15: #{_lambda_.1} parent=1 // pred_check_branch
      %33 = sbr.rel (0) target = $region17
    $region16: #{_lambda_.1} parent=1 // pred_region
      %35 = vsyncadd [#allocation6], 0
      %s36 = sshll.u32 %s3, 4
      %s37 = int_to_ptr.hbm [resolvable:$true] %s36
      %s38 = sshll.u32 [#allocation5], 4
      %s39 = int_to_ptr.vmem [resolvable:$true] %s38
      %44 = dma.hbm_to_vmem [thread:$0]  %s37, 2048, %s39, [#allocation6], 128, 128, 8
    $region17: #{_lambda_.1} parent=1 // pred_fallthru
      _
    // Predicated region
    $region18: #{_lambda_.1} parent=1 // pred_check
      _
    $region19: #{_lambda_.1} parent=1 // pred_check_branch
      %46 = sbr.rel (0) target = $region21
    $region20: #{_lambda_.1} parent=1 // pred_region
      _
    $region21: #{_lambda_.1} parent=1 // pred_fallthru
      _
    // Predicated region
    $region22: #{_lambda_.1} parent=1 // pred_check
      _
    $region23: #{_lambda_.1} parent=1 // pred_check_branch
      %48 = sbr.rel (0) target = $region25
    $region24: #{_lambda_.1} parent=1 // pred_region
      %50 = vsyncadd [#allocation6], 0
      %s51 = sshll.u32 %s5, 4
      %s52 = int_to_ptr.hbm [resolvable:$true] %s51
      %s53 = sshll.u32 [#allocation7], 4
      %s54 = int_to_ptr.vmem [resolvable:$true] %s53
      %59 = dma.hbm_to_vmem [thread:$0]  %s52, 2048, %s54, [#allocation6], 128, 128, 8
    $region25: #{_lambda_.1} parent=1 // pred_fallthru
      _
    // Predicated region
    $region26: #{_lambda_.1} parent=1 // pred_check
      _
    $region27: #{_lambda_.1} parent=1 // pred_check_branch
      %61 = sbr.rel (0) target = $region29
    $region28: #{_lambda_.1} parent=1 // pred_region
      _
    $region29: #{_lambda_.1} parent=1 // pred_fallthru
      _
    // Predicated region
    $region30: #{_lambda_.1} parent=1 // pred_check
      _
    $region31: #{_lambda_.1} parent=1 // pred_check_branch
      %63 = sbr.rel (0) target = $region33
    $region32: #{_lambda_.1} parent=1 // pred_region
      %65 = dma.done [#allocation3], 2048
    $region33: #{_lambda_.1} parent=1 // pred_fallthru
      _
    // Predicated region
    $region34: #{_lambda_.1} parent=1 // pred_check
      _
    $region35: #{_lambda_.1} parent=1 // pred_check_branch
      %67 = sbr.rel (0) target = $region37
    $region36: #{_lambda_.1} parent=1 // pred_region
      %69 = dma.done [#allocation6], 2048
    $region37: #{_lambda_.1} parent=1 // pred_fallthru
      _
    // Predicated region
    $region38: #{_lambda_.1} parent=1 // pred_check
      _
    $region39: #{_lambda_.1} parent=1 // pred_check_branch
      %71 = sbr.rel (0) target = $region41
    $region40: #{_lambda_.1} parent=1 // pred_region
      %73 = dma.done [#allocation6], 2048
    $region41: #{_lambda_.1} parent=1 // pred_fallthru
      _
    %v74 = vld [vmem:[%s0] sm:$0xff]
    %v75 = vld [vmem:[#allocation2] sm:$0xff]
    %v76 = vld [vmem:[#allocation2 + $0x8] sm:$0xff]
    %v77 = vld [vmem:[#allocation2 + $0x10] sm:$0xff]
    %v78 = vld [vmem:[#allocation2 + $0x18] sm:$0xff]
    %v79 = vld [vmem:[#allocation2 + $0x20] sm:$0xff]
    %v80 = vld [vmem:[#allocation2 + $0x28] sm:$0xff]
    %v81 = vld [vmem:[#allocation2 + $0x30] sm:$0xff]
    %v82 = vld [vmem:[#allocation2 + $0x38] sm:$0xff]
    %v83 = vld [vmem:[#allocation2 + $0x40] sm:$0xff]
    %v84 = vld [vmem:[#allocation2 + $0x48] sm:$0xff]
    %v85 = vld [vmem:[#allocation2 + $0x50] sm:$0xff]
    %v86 = vld [vmem:[#allocation2 + $0x58] sm:$0xff]
    %v87 = vld [vmem:[#allocation2 + $0x60] sm:$0xff]
    %v88 = vld [vmem:[#allocation2 + $0x68] sm:$0xff]
    %v89 = vld [vmem:[#allocation2 + $0x70] sm:$0xff]
    %v90 = vld [vmem:[#allocation2 + $0x78] sm:$0xff]
    %v91 = vld [vmem:[%s2] sm:$0x1]
    %v93 = vperm.slane %v91, 0
    %95 = vmatpush.msra.mxu0 %v90
    %96 = vmatpush.msra.mxu0 %v89
    %97 = vmatpush.msra.mxu0 %v88
    %98 = vmatpush.msra.mxu0 %v87
    %99 = vmatpush.msra.mxu0 %v86
    %100 = vmatpush.msra.mxu0 %v85
    %101 = vmatpush.msra.mxu0 %v84
    %102 = vmatpush.msra.mxu0 %v83
    %103 = vmatpush.msra.mxu0 %v82
    %104 = vmatpush.msra.mxu0 %v81
    %105 = vmatpush.msra.mxu0 %v80
    %106 = vmatpush.msra.mxu0 %v79
    %107 = vmatpush.msra.mxu0 %v78
    %108 = vmatpush.msra.mxu0 %v77
    %109 = vmatpush.msra.mxu0 %v76
    %110 = vmatpush.msra.mxu0 %v75
    %111 = vmatmul.f32.gmra.mxu0 %v74
    %v112 = vpop.f32.mrf.mxu0
    %v113 = vadd.f32 %v93, %v112
    %114 = vdwg.mxu0
    %v115 = vmax.f32 %v113, 0.0
    %v116 = vld [vmem:[#allocation5] sm:$0xff]
    %v117 = vld [vmem:[#allocation5 + $0x8] sm:$0xff]
    %v118 = vld [vmem:[#allocation5 + $0x10] sm:$0xff]
    %v119 = vld [vmem:[#allocation5 + $0x18] sm:$0xff]
    %v120 = vld [vmem:[#allocation5 + $0x20] sm:$0xff]
    %v121 = vld [vmem:[#allocation5 + $0x28] sm:$0xff]
    %v122 = vld [vmem:[#allocation5 + $0x30] sm:$0xff]
    %v123 = vld [vmem:[#allocation5 + $0x38] sm:$0xff]
    %v124 = vld [vmem:[#allocation5 + $0x40] sm:$0xff]
    %v125 = vld [vmem:[#allocation5 + $0x48] sm:$0xff]
    %v126 = vld [vmem:[#allocation5 + $0x50] sm:$0xff]
    %v127 = vld [vmem:[#allocation5 + $0x58] sm:$0xff]
    %v128 = vld [vmem:[#allocation5 + $0x60] sm:$0xff]
    %v129 = vld [vmem:[#allocation5 + $0x68] sm:$0xff]
    %v130 = vld [vmem:[#allocation5 + $0x70] sm:$0xff]
    %v131 = vld [vmem:[#allocation5 + $0x78] sm:$0xff]
    %v132 = vld [vmem:[%s4] sm:$0x1]
    %v134 = vperm.slane %v132, 0
    %136 = vmatpush.msra.mxu0 %v131
    %137 = vmatpush.msra.mxu0 %v130
    %138 = vmatpush.msra.mxu0 %v129
    %139 = vmatpush.msra.mxu0 %v128
    %140 = vmatpush.msra.mxu0 %v127
    %141 = vmatpush.msra.mxu0 %v126
    %142 = vmatpush.msra.mxu0 %v125
    %143 = vmatpush.msra.mxu0 %v124
    %144 = vmatpush.msra.mxu0 %v123
    %145 = vmatpush.msra.mxu0 %v122
    %146 = vmatpush.msra.mxu0 %v121
    %147 = vmatpush.msra.mxu0 %v120
    %148 = vmatpush.msra.mxu0 %v119
    %149 = vmatpush.msra.mxu0 %v118
    %150 = vmatpush.msra.mxu0 %v117
    %151 = vmatpush.msra.mxu0 %v116
    %152 = vmatmul.f32.gmra.mxu0 %v115
    %v153 = vpop.f32.mrf.mxu0
    %v154 = vadd.f32 %v134, %v153
    %155 = vdwg.mxu0
    %v156 = vmax.f32 %v154, 0.0
    %v157 = vld [vmem:[#allocation7] sm:$0xff]
    %v158 = vld [vmem:[#allocation7 + $0x8] sm:$0xff]
    %v159 = vld [vmem:[#allocation7 + $0x10] sm:$0xff]
    %v160 = vld [vmem:[#allocation7 + $0x18] sm:$0xff]
    %v161 = vld [vmem:[#allocation7 + $0x20] sm:$0xff]
    %v162 = vld [vmem:[#allocation7 + $0x28] sm:$0xff]
    %v163 = vld [vmem:[#allocation7 + $0x30] sm:$0xff]
    %v164 = vld [vmem:[#allocation7 + $0x38] sm:$0xff]
    %v165 = vld [vmem:[#allocation7 + $0x40] sm:$0xff]
    %v166 = vld [vmem:[#allocation7 + $0x48] sm:$0xff]
    %v167 = vld [vmem:[#allocation7 + $0x50] sm:$0xff]
    %v168 = vld [vmem:[#allocation7 + $0x58] sm:$0xff]
    %v169 = vld [vmem:[#allocation7 + $0x60] sm:$0xff]
    %v170 = vld [vmem:[#allocation7 + $0x68] sm:$0xff]
    %v171 = vld [vmem:[#allocation7 + $0x70] sm:$0xff]
    %v172 = vld [vmem:[#allocation7 + $0x78] sm:$0xff]
    %v173 = vld [vmem:[%s6] sm:$0x1]
    %v175 = vperm.slane %v173, 0
    %177 = vmatpush.msra.mxu0 %v172
    %178 = vmatpush.msra.mxu0 %v171
    %179 = vmatpush.msra.mxu0 %v170
    %180 = vmatpush.msra.mxu0 %v169
    %181 = vmatpush.msra.mxu0 %v168
    %182 = vmatpush.msra.mxu0 %v167
    %183 = vmatpush.msra.mxu0 %v166
    %184 = vmatpush.msra.mxu0 %v165
    %185 = vmatpush.msra.mxu0 %v164
    %186 = vmatpush.msra.mxu0 %v163
    %187 = vmatpush.msra.mxu0 %v162
    %188 = vmatpush.msra.mxu0 %v161
    %189 = vmatpush.msra.mxu0 %v160
    %190 = vmatpush.msra.mxu0 %v159
    %191 = vmatpush.msra.mxu0 %v158
    %192 = vmatpush.msra.mxu0 %v157
    %193 = vmatmul.f32.gmra.mxu0 %v156
    %v194 = vpop.f32.mrf.mxu0
    %v195 = vadd.f32 %v175, %v194
    %196 = vdwg.mxu0
    %197 = vst [vmem:[#allocation8] sm:$0xff] %v195
    // Predicated region
    $region42: #{_lambda_.1} parent=1 // pred_check
      _
    $region43: #{_lambda_.1} parent=1 // pred_check_branch
      %199 = sbr.rel (0) target = $region45
    $region44: #{_lambda_.1} parent=1 // pred_region
      %201 = vsyncadd [#allocation4], 0
      %s203 = sshll.u32 [#allocation8], 4
      %s204 = int_to_ptr.vmem [resolvable:$true] %s203
      %s205 = sshll.u32 %s7, 4
      %s206 = int_to_ptr.hbm [resolvable:$true] %s205
      %208 = dma.vmem_to_hbm [thread:$0]  %s204, 128, %s206, [#allocation4]
    $region45: #{_lambda_.1} parent=1 // pred_fallthru
      _
    // Predicated region
    $region46: #{_lambda_.1} parent=1 // pred_check
      _
    $region47: #{_lambda_.1} parent=1 // pred_check_branch
      %210 = sbr.rel (0) target = $region49
    $region48: #{_lambda_.1} parent=1 // pred_region
      %212 = dma.done [#allocation4], 128
    $region49: #{_lambda_.1} parent=1 // pred_fallthru
      _
    %213 = vsyncpa [#allocation3], 1
    %214 = vsyncpa [#allocation6], 1
    %215 = vsyncpa [#allocation4], 1

</llo_original>
